<compile_context>
chip_gen: v7x
topology: tpu7x:2x2x1
jax: 0.10.0
libtpu: 0.0.40
codegen_flags: <defaults>
</compile_context>

<pallas_src>
import functools

import jax
import jax.numpy as jnp
from jax.experimental import pallas as pl
from jax.experimental.pallas import tpu as pltpu

EPS = 1e-5  # nn.LayerNorm default


def _round_up(x, m):
    return (x + m - 1) // m * m


@functools.lru_cache(maxsize=None)
def _vmem_capacity_bytes():
    try:
        return int(pltpu.get_tpu_info().vmem_capacity_bytes)
    except Exception:
        return 64 * 2**20  # conservative fallback (v7x per-TC VMEM)


def _prenorm_kernel(x_ref, gamma_ref, beta_ref, w_ref, b_ref, o_ref, y_ref):
    # x_ref:     (tile_rows, D)       rows to normalize
    # gamma_ref: (1, D)               LayerNorm weight
    # beta_ref:  (1, D)               LayerNorm bias
    # w_ref:     (D, tile_n)          fn (Linear) weight slab, stored (in, out)
    # b_ref:     (1, tile_n)          fn (Linear) bias slab
    # o_ref:     (tile_rows, tile_n)  output slab (lane-dense, 128-multiple)
    # y_ref:     (tile_rows, D)       VMEM scratch: normalized acts in w.dtype

    # LayerNorm only for the first output-feature block of each row tile; the
    # result is cached in VMEM and reused for all j blocks.
    @pl.when(pl.program_id(1) == 0)
    def _():
        x = x_ref[...].astype(jnp.float32)
        inv_d = jnp.float32(1.0 / x.shape[-1])
        s = jnp.sum(x, axis=-1, keepdims=True)
        sq = jnp.sum(x * x, axis=-1, keepdims=True)
        mean = s * inv_d
        var = sq * inv_d - mean * mean          # biased variance, one pass
        inv = jax.lax.rsqrt(var + EPS)
        y = (x - mean) * inv * gamma_ref[...].astype(jnp.float32) \
            + beta_ref[...].astype(jnp.float32)
        y_ref[...] = y.astype(y_ref.dtype)

    # fn: Linear -> y @ W + b on the MXU (operand dtype = W dtype, f32 acc).
    out = jnp.dot(y_ref[...], w_ref[...], preferred_element_type=jnp.float32)
    out = out + b_ref[...].astype(jnp.float32)
    o_ref[...] = out.astype(o_ref.dtype)


@functools.partial(jax.jit, static_argnames=("tile_rows", "tile_n"))
def prenorm(x, gamma, beta, w, b, *, tile_rows=None, tile_n=None):
    """x: (B, S, D). Returns fn(LayerNorm(x)) with fn = Linear(D, D_out).

    gamma/beta: LayerNorm affine params, shape (D,) or (1, D).
    w: (D, D_out) Linear weight stored as (in, out); pass bf16 for peak MXU perf
       (f32 weights take the slow multi-pass MXU path and double W streaming).
    b: (D_out,) or (1, D_out) Linear bias.
    """
    B, S, D = x.shape
    D_out = w.shape[1]
    rows = B * S

    x_it = jnp.dtype(x.dtype).itemsize
    w_it = jnp.dtype(w.dtype).itemsize
    out_it = x_it
    y_it = w_it

    vmem_cap = _vmem_capacity_bytes()
    budget = int(0.85 * vmem_cap)

    def usage(tr, tn):
        return (2 * tr * D * x_it          # x tile (double-buffered)
                + 2 * tr * tn * out_it     # out tile (double-buffered)
                + 2 * D * tn * w_it        # W slab (double-buffered)
                + tr * D * y_it            # y scratch (cached normalized acts)
                + 3 * tr * D * 4           # f32 LayerNorm temporaries
                + tr * tn * 4              # f32 matmul result temp
                + 8 * (D + tn) * 4         # gamma/beta/b (+buffering)
                + (2 << 20))               # compiler slack

    # ---- tile_n: collapse the j axis when the whole W slab fits VMEM ----
    n_pad = _round_up(D_out, 128)
    min_tr = max(8, min(_round_up(rows, 8), 256))
    if tile_n is None:
        if usage(min_tr, n_pad) <= budget:
            tile_n = n_pad                       # W fetched exactly once
        else:
            tile_n = 512
            while tile_n > 128 and usage(min_tr, tile_n) > budget:
                tile_n //= 2
            tile_n = min(tile_n, n_pad)
            n_pad = _round_up(D_out, tile_n)
    else:
        tile_n = max(128, _round_up(min(tile_n, n_pad), 128))
        n_pad = _round_up(D_out, tile_n)

    # ---- tile_rows: generation-aware target, shrunk to fit the VMEM budget ----
    if tile_rows is None:
        row_target = 1024 if vmem_cap >= (96 << 20) else 768   # v5e/v6e vs v7x
        tr = max(8, min(row_target, _round_up(rows, 8)))
        while tr > 8 and usage(tr, tile_n) > budget:
            tr -= 8
        tr_cap = tr
        if rows <= tr_cap:
            tile_rows = max(8, _round_up(rows, 8))     # single row tile
        elif rows % tr_cap == 0:
            tile_rows = tr_cap                         # no row padding needed
        else:
            # prefer a divisor of rows (avoids the pad + slice HBM round trip)
            best, cand = 0, tr_cap
            while cand >= 8:
                if rows % cand == 0:
                    best = cand
                    break
                cand -= 8
            tile_rows = best if best >= max(64, tr_cap // 4) else tr_cap
    else:
        tile_rows = max(8, _round_up(min(tile_rows, _round_up(rows, 8)), 8))

    rows_pad = _round_up(rows, tile_rows)
    grid = (rows_pad // tile_rows, n_pad // tile_n)

    # ---- operands: pad only when actually needed ----
    x2 = x.reshape(rows, D)
    if rows_pad != rows:
        x2 = jnp.pad(x2, ((0, rows_pad - rows), (0, 0)))
    gamma2 = gamma.reshape(1, D)
    beta2 = beta.reshape(1, D)
    w2 = w if n_pad == D_out else jnp.pad(w, ((0, 0), (0, n_pad - D_out)))
    b2 = b.reshape(1, D_out)
    if n_pad != D_out:
        b2 = jnp.pad(b2, ((0, 0), (0, n_pad - D_out)))

    # ---- scheduler hint & VMEM budget ----
    flops = 2 * rows_pad * D * n_pad
    bytes_accessed = (rows_pad * D * x_it
                      + grid[0] * D * n_pad * w_it      # W streamed once per row tile
                      + n_pad * jnp.dtype(b2.dtype).itemsize
                      + 2 * D * 4
                      + rows_pad * n_pad * out_it)
    cost = pl.CostEstimate(flops=flops, transcendentals=0,
                           bytes_accessed=bytes_accessed)
    vmem_limit = int(min(budget, max(32 * 2**20, usage(tile_rows, tile_n))))

    out2 = pl.pallas_call(
        _prenorm_kernel,
        out_shape=jax.ShapeDtypeStruct((rows_pad, n_pad), x.dtype),
        grid_spec=pltpu.PrefetchScalarGridSpec(
            num_scalar_prefetch=0,
            grid=grid,
            in_specs=[
                pl.BlockSpec((tile_rows, D), lambda i, j: (i, 0)),
                pl.BlockSpec((1, D), lambda i, j: (0, 0)),
                pl.BlockSpec((1, D), lambda i, j: (0, 0)),
                pl.BlockSpec((D, tile_n), lambda i, j: (0, j)),
                pl.BlockSpec((1, tile_n), lambda i, j: (0, j)),
            ],
            out_specs=pl.BlockSpec((tile_rows, tile_n), lambda i, j: (i, j)),
            scratch_shapes=[pltpu.VMEM((tile_rows, D), w.dtype)],
        ),
        compiler_params=pltpu.CompilerParams(
            dimension_semantics=("parallel", "arbitrary"),
            vmem_limit_bytes=vmem_limit),
        cost_estimate=cost,
    )(x2, gamma2, beta2, w2, b2)

    if rows_pad != rows or n_pad != D_out:
        out2 = out2[:rows, :D_out]
    return out2.reshape(B, S, D_out)


def _reference(x, gamma, beta, w, b):
    xf = x.astype(jnp.float32)
    mean = jnp.mean(xf, axis=-1, keepdims=True)
    var = jnp.mean((xf - mean) ** 2, axis=-1, keepdims=True)
    y = (xf - mean) * jax.lax.rsqrt(var + EPS) * gamma.reshape(-1).astype(jnp.float32) \
        + beta.reshape(-1).astype(jnp.float32)
    out = y @ w.astype(jnp.float32) + b.reshape(-1).astype(jnp.float32)
    return out.astype(x.dtype)


if __name__ == "__main__":
    key = jax.random.PRNGKey(0)
    k1, k2, k3, k4, k5 = jax.random.split(key, 5)

    # ---- Case 1: B=2, S=8, D=32, fn = Linear(32, 32), f32 ----
    B, S, D = 2, 8, 32
    x = jax.random.normal(k1, (B, S, D), dtype=jnp.float32)
    gamma = jnp.ones((1, D), dtype=jnp.float32)    # PyTorch LayerNorm init
    beta = jnp.zeros((1, D), dtype=jnp.float32)
    w = jax.random.normal(k2, (D, D), dtype=jnp.float32) * 0.05
    b = jax.random.normal(k3, (1, D), dtype=jnp.float32) * 0.05

    out = prenorm(x, gamma, beta, w, b)
    jax.block_until_ready(out)
    ref = _reference(x, gamma, beta, w, b)
    assert out.shape == (B, S, D), out.shape
    assert jnp.allclose(out, ref, atol=2e-4, rtol=2e-4), "mismatch vs reference (case 1)"

    # ---- Case 2: ragged rows (B*S not tile-aligned), D_out not 128-multiple ----
    B2, S2, D2, N2 = 2, 7, 32, 48
    x_b = jax.random.normal(k4, (B2, S2, D2), dtype=jnp.float32)
    g_b = jnp.ones((1, D2), dtype=jnp.float32)
    bt_b = jnp.zeros((1, D2), dtype=jnp.float32)
    w_b = jax.random.normal(k2, (D2, N2), dtype=jnp.float32) * 0.05
    b_b = jax.random.normal(k3, (1, N2), dtype=jnp.float32) * 0.05

    out_b = prenorm(x_b, g_b, bt_b, w_b, b_b)
    jax.block_until_ready(out_b)
    ref_b = _reference(x_b, g_b, bt_b, w_b, b_b)
    assert out_b.shape == (B2, S2, N2), out_b.shape
    assert jnp.allclose(out_b, ref_b, atol=2e-4, rtol=2e-4), "mismatch vs reference (case 2)"

    # ---- Case 3: bf16 activations + bf16 weights (MXU fast path) ----
    B3, S3, D3, N3 = 2, 8, 64, 128
    x_c = jax.random.normal(k5, (B3, S3, D3), dtype=jnp.float32).astype(jnp.bfloat16)
    g_c = jnp.ones((1, D3), dtype=jnp.bfloat16)
    bt_c = jnp.zeros((1, D3), dtype=jnp.bfloat16)
    w_c = (jax.random.normal(k2, (D3, N3), dtype=jnp.float32) * 0.05).astype(jnp.bfloat16)
    b_c = (jax.random.normal(k3, (1, N3), dtype=jnp.float32) * 0.05).astype(jnp.bfloat16)

    out_c = prenorm(x_c, g_c, bt_c, w_c, b_c)
    jax.block_until_ready(out_c)
    ref_c = _reference(x_c, g_c, bt_c, w_c, b_c)
    assert out_c.shape == (B3, S3, N3), out_c.shape
    assert jnp.allclose(out_c.astype(jnp.float32), ref_c.astype(jnp.float32),
                        atol=3e-2, rtol=3e-2), "mismatch vs reference (case 3)"

    print("KERNEL_OK")
</pallas_src>

<mosaic_0001>
module attributes {stable_mosaic.version = 11 : i64} {
  func.func @_prenorm_kernel(%arg0: i32, %arg1: i32, %arg2: memref<16x32xf32, #tpu.memory_space<vmem>>, %arg3: memref<1x32xf32, #tpu.memory_space<vmem>>, %arg4: memref<1x32xf32, #tpu.memory_space<vmem>>, %arg5: memref<32x128xf32, #tpu.memory_space<vmem>>, %arg6: memref<1x128xf32, #tpu.memory_space<vmem>>, %arg7: memref<16x128xf32, #tpu.memory_space<vmem>>, %arg8: memref<16x32xf32, #tpu.memory_space<vmem>>) attributes {dimension_semantics = [#tpu.dimension_semantics<parallel>, #tpu.dimension_semantics<arbitrary>], iteration_bounds = array<i64: 1, 1>, scalar_prefetch = 0 : i64, scratch_operands = 1 : i64, tpu.core_type = #tpu.core_type<tc>, window_params = [{transform_indices = @transform_0, window_bounds = array<i64: 16, 32>}, {pipeline_mode = #tpu.pipeline_mode<synchronous>, transform_indices = @transform_1, window_bounds = array<i64: 1, 32>}, {pipeline_mode = #tpu.pipeline_mode<synchronous>, transform_indices = @transform_2, window_bounds = array<i64: 1, 32>}, {transform_indices = @transform_3, window_bounds = array<i64: 32, 128>}, {transform_indices = @transform_4, window_bounds = array<i64: 1, 128>}, {transform_indices = @transform_5, window_bounds = array<i64: 16, 128>}]} {
    %c0_i32 = arith.constant 0 : i32
    %0 = arith.cmpi eq, %arg1, %c0_i32 : i32
    %1 = arith.extui %0 : i1 to i32
    %c0_i32_0 = arith.constant 0 : i32
    %2 = arith.cmpi ne, %1, %c0_i32_0 : i32
    scf.if %2 {
      %c0_8 = arith.constant 0 : index
      %c0_9 = arith.constant 0 : index
      %10 = vector.load %arg2[%c0_8, %c0_9] : memref<16x32xf32, #tpu.memory_space<vmem>>, vector<16x32xf32>
      %cst_10 = arith.constant dense<0.000000e+00> : vector<16xf32>
      %11 = vector.multi_reduction <add>, %10, %cst_10 [1] : vector<16x32xf32> to vector<16xf32>
      %12 = vector.shape_cast %11 : vector<16xf32> to vector<16x1xf32>
      %13 = arith.mulf %10, %10 : vector<16x32xf32>
      %cst_11 = arith.constant dense<0.000000e+00> : vector<16xf32>
      %14 = vector.multi_reduction <add>, %13, %cst_11 [1] : vector<16x32xf32> to vector<16xf32>
      %15 = vector.shape_cast %14 : vector<16xf32> to vector<16x1xf32>
      %cst_12 = arith.constant 3.125000e-02 : f32
      %16 = vector.broadcast %cst_12 : f32 to vector<16x1xf32>
      %17 = arith.mulf %12, %16 : vector<16x1xf32>
      %cst_13 = arith.constant 3.125000e-02 : f32
      %18 = vector.broadcast %cst_13 : f32 to vector<16x1xf32>
      %19 = arith.mulf %15, %18 : vector<16x1xf32>
      %20 = arith.mulf %17, %17 : vector<16x1xf32>
      %21 = arith.subf %19, %20 : vector<16x1xf32>
      %cst_14 = arith.constant 9.99999974E-6 : f32
      %22 = vector.broadcast %cst_14 : f32 to vector<16x1xf32>
      %23 = arith.addf %21, %22 : vector<16x1xf32>
      %24 = math.rsqrt %23 : vector<16x1xf32>
      %25 = vector.broadcast %17 : vector<16x1xf32> to vector<16x32xf32>
      %26 = arith.subf %10, %25 : vector<16x32xf32>
      %27 = vector.broadcast %24 : vector<16x1xf32> to vector<16x32xf32>
      %28 = arith.mulf %26, %27 : vector<16x32xf32>
      %c0_15 = arith.constant 0 : index
      %c0_16 = arith.constant 0 : index
      %29 = vector.load %arg3[%c0_15, %c0_16] : memref<1x32xf32, #tpu.memory_space<vmem>>, vector<1x32xf32>
      %30 = vector.broadcast %29 : vector<1x32xf32> to vector<16x32xf32>
      %31 = arith.mulf %28, %30 : vector<16x32xf32>
      %c0_17 = arith.constant 0 : index
      %c0_18 = arith.constant 0 : index
      %32 = vector.load %arg4[%c0_17, %c0_18] : memref<1x32xf32, #tpu.memory_space<vmem>>, vector<1x32xf32>
      %33 = vector.broadcast %32 : vector<1x32xf32> to vector<16x32xf32>
      %34 = arith.addf %31, %33 : vector<16x32xf32>
      %c0_19 = arith.constant 0 : index
      %c0_20 = arith.constant 0 : index
      %35 = vector.load %arg8[%c0_19, %c0_20] : memref<16x32xf32, #tpu.memory_space<vmem>>, vector<16x32xf32>
      tpu.vector_store %arg8[%c0_19, %c0_20], %34 {strides = array<i32>} : memref<16x32xf32, #tpu.memory_space<vmem>>, vector<16x32xf32>,
    } else {
    }
    %c0 = arith.constant 0 : index
    %c0_1 = arith.constant 0 : index
    %3 = vector.load %arg8[%c0, %c0_1] : memref<16x32xf32, #tpu.memory_space<vmem>>, vector<16x32xf32>
    %c0_2 = arith.constant 0 : index
    %c0_3 = arith.constant 0 : index
    %4 = vector.load %arg5[%c0_2, %c0_3] : memref<32x128xf32, #tpu.memory_space<vmem>>, vector<32x128xf32>
    %cst = arith.constant dense<0.000000e+00> : vector<16x128xf32>
    %5 = tpu.matmul %3, %4, %cst {dimension_numbers = #tpu.dot_dimension_numbers<[1], [0], [0], [1], [0, 0, 1, 1], [], []>} : vector<16x32xf32>, vector<32x128xf32>, vector<16x128xf32> -> vector<16x128xf32>
    %c0_4 = arith.constant 0 : index
    %c0_5 = arith.constant 0 : index
    %6 = vector.load %arg6[%c0_4, %c0_5] : memref<1x128xf32, #tpu.memory_space<vmem>>, vector<1x128xf32>
    %7 = vector.broadcast %6 : vector<1x128xf32> to vector<16x128xf32>
    %8 = arith.addf %5, %7 : vector<16x128xf32>
    %c0_6 = arith.constant 0 : index
    %c0_7 = arith.constant 0 : index
    %9 = vector.load %arg7[%c0_6, %c0_7] : memref<16x128xf32, #tpu.memory_space<vmem>>, vector<16x128xf32>
    tpu.vector_store %arg7[%c0_6, %c0_7], %8 {strides = array<i32>} : memref<16x128xf32, #tpu.memory_space<vmem>>, vector<16x128xf32>,
    return
  }
  func.func @transform_0(%arg0: i32, %arg1: i32) -> (i32, i32) {
    %c0_i32 = arith.constant 0 : i32
    %c0_i32_0 = arith.constant 0 : i32
    return %arg0, %c0_i32 : i32, i32
  }
  func.func @transform_1(%arg0: i32, %arg1: i32) -> (i32, i32) {
    %c0_i32 = arith.constant 0 : i32
    %c0_i32_0 = arith.constant 0 : i32
    %c0_i32_1 = arith.constant 0 : i32
    return %c0_i32, %c0_i32_0 : i32, i32
  }
  func.func @transform_2(%arg0: i32, %arg1: i32) -> (i32, i32) {
    %c0_i32 = arith.constant 0 : i32
    %c0_i32_0 = arith.constant 0 : i32
    %c0_i32_1 = arith.constant 0 : i32
    return %c0_i32, %c0_i32_0 : i32, i32
  }
  func.func @transform_3(%arg0: i32, %arg1: i32) -> (i32, i32) {
    %c0_i32 = arith.constant 0 : i32
    %c0_i32_0 = arith.constant 0 : i32
    return %c0_i32, %arg1 : i32, i32
  }
  func.func @transform_4(%arg0: i32, %arg1: i32) -> (i32, i32) {
    %c0_i32 = arith.constant 0 : i32
    %c0_i32_0 = arith.constant 0 : i32
    return %c0_i32, %arg1 : i32, i32
  }
  func.func @transform_5(%arg0: i32, %arg1: i32) -> (i32, i32) {
    %c0_i32 = arith.constant 0 : i32
    return %arg0, %arg1 : i32, i32
  }
}

</mosaic_0001>

<llo_original>
// kernel: prenorm.1
$region0: #{prenorm.1}
  #allocation0 [shape = 'u32[]', space=smem, size = 0x4, offset = 0x4, fixed_abs, tag = 'smem constant byte address 0x4 - core index']
  #allocation1 [shape = 'u32[144,128]{1,0:T(1,128)}', space=vmem, size = 0x12000, scoped, tag = 'internal scratch']
  #allocation2 [shape = 'f32[16,32]{1,0:T(8,128)}', space=vmem, size = 0x2000, scoped, tag = 'scratch operand']
  %s0 = inlined_call_operand.vmem [shape: f32[16,32], index: 0, kind: input, shape index: {}]
  %s1 = inlined_call_operand.vmem [shape: f32[1,32], index: 1, kind: input, shape index: {}]
  %s2 = inlined_call_operand.vmem [shape: f32[1,32], index: 2, kind: input, shape index: {}]
  %s3 = inlined_call_operand.vmem [shape: f32[32,128], index: 3, kind: input, shape index: {}]
  %s4 = inlined_call_operand.vmem [shape: f32[1,128], index: 4, kind: input, shape index: {}]
  %s5 = inlined_call_operand.vmem [shape: f32[16,128], index: 5, kind: output, shape index: {}]
  %s6 = sld [smem:[#allocation0]]
  $region34: #{prenorm.1} parent=0
    _
  %s8 = ssub.s32 1, %s6
  %s9 = scalar_select 0, %s8, %s6
  // Predicated region
  $region2: #{prenorm.1} parent=0 // pred_check
    _
  $region3: #{prenorm.1} parent=0 // pred_check_branch
    %11 = sbr.rel (0) target = $region5
  $region4: #{prenorm.1} parent=0 // pred_region
    _
  $region5: #{prenorm.1} parent=0 // pred_fallthru
    _
  // Predicated region
  $region6: #{prenorm.1} parent=0 // pred_check
    _
  $region7: #{prenorm.1} parent=0 // pred_check_branch
    %13 = sbr.rel (0) target = $region9
  $region8: #{prenorm.1} parent=0 // pred_region
    _
  $region9: #{prenorm.1} parent=0 // pred_fallthru
    _
  // Predicated region
  $region10: #{prenorm.1} parent=0 // pred_check
    _
  $region11: #{prenorm.1} parent=0 // pred_check_branch
    %15 = sbr.rel (0) target = $region13
  $region12: #{prenorm.1} parent=0 // pred_region
    _
  $region13: #{prenorm.1} parent=0 // pred_fallthru
    _
  // Predicated region
  $region14: #{prenorm.1} parent=0 // pred_check
    _
  $region15: #{prenorm.1} parent=0 // pred_check_branch
    %17 = sbr.rel (0) target = $region17
  $region16: #{prenorm.1} parent=0 // pred_region
    _
  $region17: #{prenorm.1} parent=0 // pred_fallthru
    _
  // Predicated region
  $region18: #{prenorm.1} parent=0 // pred_check
    _
  $region19: #{prenorm.1} parent=0 // pred_check_branch
    %19 = sbr.rel (0) target = $region21
  $region20: #{prenorm.1} parent=0 // pred_region
    _
  $region21: #{prenorm.1} parent=0 // pred_fallthru
    _
  %p20 = scmp.eq.s32.totalorder 0, 0
  // Predicated region
  $region22: #{prenorm.1} parent=0 // pred_check
    %p21 = pneg %p20
  $region23: #{prenorm.1} parent=0 // pred_check_branch
    %23 = sbr.rel (%p21) target = $region25
  $region24: #{prenorm.1} parent=0 // pred_region
    %v24 = vld [vmem:[%s0] sm:$0xff]
    %v25 = vld [vmem:[%s0 + $0x8] sm:$0xff]
    %vm26 = vcmask 261120
    %v27 = vsel %vm26, %v24, 0.0
    %28 = vadd.xlane.f32.xlu0 %v27
    %v29 = vpop.xlane.xlu0 %28
    %v30 = vsel %vm26, %v25, 0.0
    %31 = vadd.xlane.f32.xlu0 %v30
    %v32 = vpop.xlane.xlu0 %31
    %v33 = vmul.f32 %v24, %v24
    %v34 = vmul.f32 %v25, %v25
    %v35 = vsel %vm26, %v33, 0.0
    %36 = vadd.xlane.f32.xlu0 %v35
    %v37 = vpop.xlane.xlu0 %36
    %v38 = vsel %vm26, %v34, 0.0
    %39 = vadd.xlane.f32.xlu0 %v38
    %v40 = vpop.xlane.xlu0 %39
    %v41 = vmul.f32 %v29, 0.03125
    %v42 = vmul.f32 %v32, 0.03125
    %v43 = vmul.f32 %v37, 0.03125
    %v44 = vmul.f32 %v40, 0.03125
    %v45 = vmul.f32 %v41, %v41
    %v46 = vmul.f32 %v42, %v42
    %v47 = vsub.f32 %v43, %v45
    %v48 = vsub.f32 %v44, %v46
    %v49 = vadd.f32 %v47, 1e-05
    %v50 = vadd.f32 %v48, 1e-05
    %v51 = vrsqrt.pop %v49
    %v52 = vrsqrt.pop %v50
    %v53 = vsub.f32 %v24, %v41
    %v54 = vsub.f32 %v25, %v42
    %v55 = vmul.f32 %v53, %v51
    %v56 = vmul.f32 %v54, %v52
    %v57 = vld [vmem:[%s1] sm:$0x1]
    %v59 = vlaneseq
    %v60 = vshrl.u32 %v59, 7
    %v61 = vsub.s32 0, %v60
    %v62 = vrot.slane %v57, %v61
    %v64 = vmul.f32 %v55, %v62
    %v65 = vmul.f32 %v56, %v62
    %v66 = vld [vmem:[%s2] sm:$0x1]
    %v68 = vlaneseq
    %v69 = vshrl.u32 %v68, 7
    %v70 = vsub.s32 0, %v69
    %v71 = vrot.slane %v66, %v70
    %v73 = vadd.f32 %v64, %v71
    %v74 = vadd.f32 %v65, %v71
    %75 = vst.msk [vmem:[#allocation2] sm:$0xff] %vm26, %v73
    %76 = vst.msk [vmem:[#allocation2 + $0x8] sm:$0xff] %vm26, %v74
  $region25: #{prenorm.1} parent=0 // pred_fallthru
    _
  %v77 = vld [vmem:[#allocation2] sm:$0xff]
  %v78 = vld [vmem:[#allocation2 + $0x8] sm:$0xff]
  %v79 = vld [vmem:[%s3] sm:$0xff]
  %v80 = vld [vmem:[%s3 + $0x8] sm:$0xff]
  %v81 = vld [vmem:[%s3 + $0x10] sm:$0xff]
  %v82 = vld [vmem:[%s3 + $0x18] sm:$0xff]
  %v83 = vld [vmem:[%s4] sm:$0x1]
  %v85 = vlaneseq
  %v86 = vshrl.u32 %v85, 7
  %v87 = vsub.s32 0, %v86
  %v88 = vrot.slane %v83, %v87
  %vm90 = vcmask 261120
  %v92 = vsel %vm90, %v77, 0
  %v95 = vsel %vm90, %v78, 0
  %97 = vmatprep.subr.mxu0 0.0
  %98 = vmatpush1.msra.mxu0 %v79
  %99 = vmatprep.subr.mxu0 0.0
  %100 = vmatpush1.msra.mxu0 %v80
  %101 = vmatprep.subr.mxu0 0.0
  %102 = vmatpush1.msra.mxu0 %v81
  %103 = vmatprep.subr.mxu0 0.0
  %104 = vmatpush1.msra.mxu0 %v82
  %105 = vmatprep.subr.mxu0 0.0
  %106 = vmatpush1.msra.mxu0 0.0
  %107 = vmatprep.subr.mxu0 0.0
  %108 = vmatpush1.msra.mxu0 0.0
  %109 = vmatprep.subr.mxu0 0.0
  %110 = vmatpush1.msra.mxu0 0.0
  %111 = vmatprep.subr.mxu0 0.0
  %112 = vmatpush1.msra.mxu0 0.0
  %113 = vmatprep.subr.mxu0 0.0
  %114 = vmatpush1.msra.mxu0 0.0
  %115 = vmatprep.subr.mxu0 0.0
  %116 = vmatpush1.msra.mxu0 0.0
  %117 = vmatprep.subr.mxu0 0.0
  %118 = vmatpush1.msra.mxu0 0.0
  %119 = vmatprep.subr.mxu0 0.0
  %120 = vmatpush1.msra.mxu0 0.0
  %121 = vmatprep.subr.mxu0 0.0
  %122 = vmatpush1.msra.mxu0 0.0
  %123 = vmatprep.subr.mxu0 0.0
  %124 = vmatpush1.msra.mxu0 0.0
  %125 = vmatprep.subr.mxu0 0.0
  %126 = vmatpush1.msra.mxu0 0.0
  %127 = vmatprep.subr.mxu0 0.0
  %128 = vmatpush1.msra.mxu0 0.0
  %129 = vmatprep.subr.mxu0 0.0
  %130 = vmatpush1.msra.mxu0 0.0
  %131 = vmatprep.subr.mxu0 0.0
  %132 = vmatpush1.msra.mxu0 0.0
  %133 = vmatprep.subr.mxu0 0.0
  %134 = vmatpush1.msra.mxu0 0.0
  %135 = vmatprep.subr.mxu0 0.0
  %136 = vmatpush1.msra.mxu0 0.0
  %137 = vmatprep.subr.mxu0 0.0
  %138 = vmatpush1.msra.mxu0 0.0
  %139 = vmatprep.subr.mxu0 0.0
  %140 = vmatpush1.msra.mxu0 0.0
  %141 = vmatprep.subr.mxu0 0.0
  %142 = vmatpush1.msra.mxu0 0.0
  %143 = vmatprep.subr.mxu0 0.0
  %144 = vmatpush1.msra.mxu0 0.0
  %145 = vmatprep.subr.mxu0 0.0
  %146 = vmatpush1.msra.mxu0 0.0
  %147 = vmatprep.subr.mxu0 0.0
  %148 = vmatpush1.msra.mxu0 0.0
  %149 = vmatprep.subr.mxu0 0.0
  %150 = vmatpush1.msra.mxu0 0.0
  %151 = vmatprep.subr.mxu0 0.0
  %152 = vmatpush1.msra.mxu0 0.0
  %153 = vmatprep.subr.mxu0 0.0
  %154 = vmatpush1.msra.mxu0 0.0
  %155 = vmatprep.subr.mxu0 0.0
  %156 = vmatpush1.msra.mxu0 0.0
  %157 = vmatprep.subr.mxu0 0.0
  %158 = vmatpush1.msra.mxu0 0.0
  %159 = vmatprep.subr.mxu0 0.0
  %160 = vmatpush1.msra.mxu0 0.0
  %161 = vmatprep.mubr.f32.mxu0 0.0
  %162 = vmatmul.mubr.f32.gmra.mrb[0].mxu0 %v92
  %v163 = vpop.f32.mrb[0].mxu0
  %v164 = vadd.f32 %v88, %v163
  %v165 = vpop.f32.mrb[0].mxu0
  %166 = vmatprep.mubr.f32.mxu0 0.0
  %167 = vmatmul.mubr.f32.gmra.mrb[0].mxu0 %v95
  %v168 = vpop.f32.mrb[0].mxu0
  %v169 = vadd.f32 %v88, %v168
  %v170 = vpop.f32.mrb[0].mxu0
  %171 = vdwg.mxu0
  %172 = vst [vmem:[%s5] sm:$0xff] %v164
  %173 = vst [vmem:[%s5 + $0x8] sm:$0xff] %v169
  // Predicated region
  $region26: #{prenorm.1} parent=0 // pred_check
    _
  $region27: #{prenorm.1} parent=0 // pred_check_branch
    %175 = sbr.rel (0) target = $region29
  $region28: #{prenorm.1} parent=0 // pred_region
    _
  $region29: #{prenorm.1} parent=0 // pred_fallthru
    _
  // Predicated region
  $region30: #{prenorm.1} parent=0 // pred_check
    _
  $region31: #{prenorm.1} parent=0 // pred_check_branch
    %177 = sbr.rel (0) target = $region33
  $region32: #{prenorm.1} parent=0 // pred_region
    _
  $region33: #{prenorm.1} parent=0 // pred_fallthru
    _

</llo_original>
